<compile_context>
chip_gen: v6e
topology: v6e:2x2x1
jax: 0.10.0
libtpu: 0.0.40
codegen_flags: <defaults>
</compile_context>

<pallas_src>
import functools

import jax
import jax.numpy as jnp
from jax.experimental import pallas as pl
from jax.experimental.pallas import tpu as pltpu

_LANE = 128
_SUBLANE = 8


def _round_up(n, m):
    return ((n + m - 1) // m) * m


def _qnetwork_kernel(clip_ref, idx_ref, w1_ref, b1_ref, w2_ref, b2_ref, q_ref):
    # clip_ref: (1, 1)         f32  SMEM  -- clamp upper bound 1/(1-df)
    # idx_ref : (TB, 1)        i32  VMEM  -- state indices for this batch tile
    # w1_ref  : (M_pad, H_pad) f32  VMEM  -- layer-1 weight, [in, out] layout
    # b1_ref  : (1, H_pad)     f32
    # w2_ref  : (H_pad, A_pad) f32
    # b2_ref  : (1, A_pad)     f32
    # q_ref   : (TB, A_pad)    f32 output (lane-dense; real actions in [:, :A])
    tb = idx_ref.shape[0]
    m_pad = w1_ref.shape[0]

    # One-hot as an iota-compare; the "embedding lookup" is then one MXU pass.
    idx = idx_ref[...]                                            # (TB, 1)
    cols = jax.lax.broadcasted_iota(jnp.int32, (tb, m_pad), 1)    # (TB, M_pad)
    one_hot = (cols == idx).astype(jnp.float32)                   # (TB, M_pad)

    h = jnp.dot(one_hot, w1_ref[...], preferred_element_type=jnp.float32)
    h = jnp.maximum(h + b1_ref[...], 0.0)                         # Linear + ReLU

    q = jnp.dot(h, w2_ref[...], preferred_element_type=jnp.float32)
    q = q + b2_ref[...]
    q_ref[...] = jnp.clip(q, 0.0, clip_ref[0, 0])                 # clamp(q, 0, 1/(1-df))
    # TODO(synk): fuse downstream DQN consumers (max_a Q / TD-error from
    # get_values) into this epilogue (mask lanes >= A with -inf + XLU lane
    # reduce) so the padded (B,128) Q tensor never has to hit HBM.


def prepare_params(w1, b1, w2, b2):
    """Zero-pad parameters to lane multiples ONCE (call at init, not per step)."""
    M, H = w1.shape
    H2, A = w2.shape
    assert H2 == H, "w1/w2 hidden dims must match"
    M_pad = _round_up(M, _LANE)
    H_pad = _round_up(H, _LANE)
    A_pad = _round_up(A, _LANE)                    # lane-dense output store
    w1_p = jnp.zeros((M_pad, H_pad), jnp.float32).at[:M, :H].set(w1.astype(jnp.float32))
    b1_p = jnp.zeros((1, H_pad), jnp.float32).at[0, :H].set(b1.astype(jnp.float32))
    w2_p = jnp.zeros((H_pad, A_pad), jnp.float32).at[:H, :A].set(w2.astype(jnp.float32))
    b2_p = jnp.zeros((1, A_pad), jnp.float32).at[0, :A].set(b2.astype(jnp.float32))
    return {"w1": w1_p, "b1": b1_p, "w2": w2_p, "b2": b2_p, "n_actions": A}


@functools.partial(jax.jit, static_argnames=("n_actions", "block_b"))
def _forward_padded(x_idx, w1_p, b1_p, w2_p, b2_p, df, *, n_actions, block_b=512):
    M_pad, H_pad = w1_p.shape
    _, A_pad = w2_p.shape
    B = x_idx.shape[0]

    # Batch tile: big enough that typical minibatches (B <= block_b) are ONE
    # grid step; larger batches split into balanced "parallel" steps so v7x's
    # two TensorCores share them (no-op on v5e/v6e).
    TB = min(block_b, _round_up(B, _SUBLANE))
    B_pad = _round_up(B, TB)
    n_blocks = B_pad // TB

    # Only the index vector is padded per call (weights were padded at init).
    idx2d = jnp.zeros((B_pad, 1), jnp.int32).at[:B, 0].set(x_idx.astype(jnp.int32))
    clip_hi = jnp.full((1, 1), 1.0 / (1.0 - df), dtype=jnp.float32)

    cost = pl.CostEstimate(
        flops=2 * B_pad * (M_pad * H_pad + H_pad * A_pad),
        transcendentals=0,
        bytes_accessed=4 * (B_pad + M_pad * H_pad + H_pad
                            + H_pad * A_pad + A_pad + B_pad * A_pad),
    )

    q_full = pl.pallas_call(
        _qnetwork_kernel,
        out_shape=jax.ShapeDtypeStruct((B_pad, A_pad), jnp.float32),
        grid=(n_blocks,),
        in_specs=[
            # Scalar clamp bound lives in SMEM (scalar control data, not a vreg).
            pl.BlockSpec(memory_space=pltpu.MemorySpace.SMEM),
            # Per-tile state indices.
            pl.BlockSpec((TB, 1), lambda i: (i, 0)),
            # Weights/biases: constant index_maps -> VMEM-resident across the grid.
            pl.BlockSpec((M_pad, H_pad), lambda i: (0, 0)),
            pl.BlockSpec((1, H_pad), lambda i: (0, 0)),
            pl.BlockSpec((H_pad, A_pad), lambda i: (0, 0)),
            pl.BlockSpec((1, A_pad), lambda i: (0, 0)),
        ],
        out_specs=pl.BlockSpec((TB, A_pad), lambda i: (i, 0)),
        compiler_params=pltpu.CompilerParams(
            dimension_semantics=("parallel",),     # batch tiles split across TCs on v7x
        ),
        cost_estimate=cost,
    )(clip_hi, idx2d, w1_p, b1_p, w2_p, b2_p)

    return q_full[:B, :n_actions]


def qnetwork_forward(x_idx, params, df, *, block_b=512):
    """x_idx: int (B,) state indices; params from prepare_params -> q: f32 (B, A)."""
    return _forward_padded(
        x_idx, params["w1"], params["b1"], params["w2"], params["b2"], df,
        n_actions=params["n_actions"], block_b=block_b)


def _reference(x_idx, w1, b1, w2, b2, df):
    M = w1.shape[0]
    one_hot = jax.nn.one_hot(x_idx, M, dtype=jnp.float32)
    h = jnp.maximum(one_hot @ w1 + b1, 0.0)
    q = h @ w2 + b2
    return jnp.clip(q, 0.0, 1.0 / (1.0 - df))


if __name__ == "__main__":
    M = 25          # env.observation_space.n (num_classes in one_hot_encode)
    H = 128         # hidden width of critic
    A = 4           # env.action_space.n
    DF = 0.9        # args.df

    key = jax.random.PRNGKey(0)
    k_idx, k_w1, k_b1, k_w2, k_b2, k_idx2, k_idx3 = jax.random.split(key, 7)

    # Deterministic synthetic parameters (same shapes as the nn.Linear layers,
    # stored [in, out]); padded ONCE here, as a training loop would at init.
    w1 = jax.random.normal(k_w1, (M, H), dtype=jnp.float32) * 0.1
    b1 = jax.random.normal(k_b1, (H,), dtype=jnp.float32) * 0.1
    w2 = jax.random.normal(k_w2, (H, A), dtype=jnp.float32) * 0.1
    b2 = jax.random.normal(k_b2, (A,), dtype=jnp.float32) * 0.1
    params = prepare_params(w1, b1, w2, b2)

    # Small action-selection batch of discrete states in [0, M): single grid step.
    B = 8
    x = jax.random.randint(k_idx, (B,), 0, M, dtype=jnp.int32)
    q = jax.block_until_ready(qnetwork_forward(x, params, DF))
    q_ref = _reference(x, w1, b1, w2, b2, DF)
    assert q.shape == (B, A)
    assert jnp.allclose(q, q_ref, atol=1e-5, rtol=1e-5), "mismatch vs reference (B=8)"

    # Non-multiple-of-8 training minibatch: still a single grid step (TB=304).
    B2 = 300
    x2 = jax.random.randint(k_idx2, (B2,), 0, M, dtype=jnp.int32)
    q2 = jax.block_until_ready(qnetwork_forward(x2, params, DF))
    q2_ref = _reference(x2, w1, b1, w2, b2, DF)
    assert q2.shape == (B2, A)
    assert jnp.allclose(q2, q2_ref, atol=1e-5, rtol=1e-5), "mismatch vs reference (B=300)"

    # Large batch: exercises the multi-step "parallel" batch grid (2 x TB=512).
    B3 = 1000
    x3 = jax.random.randint(k_idx3, (B3,), 0, M, dtype=jnp.int32)
    q3 = jax.block_until_ready(qnetwork_forward(x3, params, DF))
    q3_ref = _reference(x3, w1, b1, w2, b2, DF)
    assert q3.shape == (B3, A)
    assert jnp.allclose(q3, q3_ref, atol=1e-5, rtol=1e-5), "mismatch vs reference (B=1000)"

    print("KERNEL_OK")
</pallas_src>

<mosaic_0001>
module attributes {stable_mosaic.version = 11 : i64} {
  func.func @_qnetwork_kernel(%arg0: i32, %arg1: memref<1x1xf32, #tpu.memory_space<smem>>, %arg2: memref<8x1xi32, #tpu.memory_space<vmem>>, %arg3: memref<128x128xf32, #tpu.memory_space<vmem>>, %arg4: memref<1x128xf32, #tpu.memory_space<vmem>>, %arg5: memref<128x128xf32, #tpu.memory_space<vmem>>, %arg6: memref<1x128xf32, #tpu.memory_space<vmem>>, %arg7: memref<8x128xf32, #tpu.memory_space<vmem>>) attributes {dimension_semantics = [#tpu.dimension_semantics<parallel>], iteration_bounds = array<i64: 1>, scalar_prefetch = 0 : i64, scratch_operands = 0 : i64, tpu.core_type = #tpu.core_type<tc>, window_params = [{transform_indices = @transform_0, window_bounds = array<i64: 1, 1>}, {transform_indices = @transform_1, window_bounds = array<i64: 8, 1>}, {pipeline_mode = #tpu.pipeline_mode<synchronous>, transform_indices = @transform_2, window_bounds = array<i64: 128, 128>}, {pipeline_mode = #tpu.pipeline_mode<synchronous>, transform_indices = @transform_3, window_bounds = array<i64: 1, 128>}, {pipeline_mode = #tpu.pipeline_mode<synchronous>, transform_indices = @transform_4, window_bounds = array<i64: 128, 128>}, {pipeline_mode = #tpu.pipeline_mode<synchronous>, transform_indices = @transform_5, window_bounds = array<i64: 1, 128>}, {transform_indices = @transform_6, window_bounds = array<i64: 8, 128>}]} {
    %c0 = arith.constant 0 : index
    %c0_0 = arith.constant 0 : index
    %0 = vector.load %arg2[%c0, %c0_0] : memref<8x1xi32, #tpu.memory_space<vmem>>, vector<8x1xi32>
    %1 = tpu.iota {dimensions = array<i32: 1>} : vector<8x128xi32>
    %2 = vector.broadcast %0 : vector<8x1xi32> to vector<8x128xi32>
    %3 = arith.cmpi eq, %1, %2 : vector<8x128xi32>
    %4 = arith.extui %3 : vector<8x128xi1> to vector<8x128xi32>
    %5 = arith.sitofp %4 : vector<8x128xi32> to vector<8x128xf32>
    %c0_1 = arith.constant 0 : index
    %c0_2 = arith.constant 0 : index
    %6 = vector.load %arg3[%c0_1, %c0_2] : memref<128x128xf32, #tpu.memory_space<vmem>>, vector<128x128xf32>
    %cst = arith.constant dense<0.000000e+00> : vector<8x128xf32>
    %7 = tpu.matmul %5, %6, %cst {dimension_numbers = #tpu.dot_dimension_numbers<[1], [0], [0], [1], [0, 0, 1, 1], [], []>} : vector<8x128xf32>, vector<128x128xf32>, vector<8x128xf32> -> vector<8x128xf32>
    %c0_3 = arith.constant 0 : index
    %c0_4 = arith.constant 0 : index
    %8 = vector.load %arg4[%c0_3, %c0_4] : memref<1x128xf32, #tpu.memory_space<vmem>>, vector<1x128xf32>
    %9 = vector.broadcast %8 : vector<1x128xf32> to vector<8x128xf32>
    %10 = arith.addf %7, %9 : vector<8x128xf32>
    %cst_5 = arith.constant 0.000000e+00 : f32
    %11 = vector.broadcast %cst_5 : f32 to vector<8x128xf32>
    %12 = arith.maximumf %10, %11 : vector<8x128xf32>
    %c0_6 = arith.constant 0 : index
    %c0_7 = arith.constant 0 : index
    %13 = vector.load %arg5[%c0_6, %c0_7] : memref<128x128xf32, #tpu.memory_space<vmem>>, vector<128x128xf32>
    %cst_8 = arith.constant dense<0.000000e+00> : vector<8x128xf32>
    %14 = tpu.matmul %12, %13, %cst_8 {dimension_numbers = #tpu.dot_dimension_numbers<[1], [0], [0], [1], [0, 0, 1, 1], [], []>} : vector<8x128xf32>, vector<128x128xf32>, vector<8x128xf32> -> vector<8x128xf32>
    %c0_9 = arith.constant 0 : index
    %c0_10 = arith.constant 0 : index
    %15 = vector.load %arg6[%c0_9, %c0_10] : memref<1x128xf32, #tpu.memory_space<vmem>>, vector<1x128xf32>
    %16 = vector.broadcast %15 : vector<1x128xf32> to vector<8x128xf32>
    %17 = arith.addf %14, %16 : vector<8x128xf32>
    %c0_11 = arith.constant 0 : index
    %c0_12 = arith.constant 0 : index
    %18 = memref.load %arg1[%c0_11, %c0_12] : memref<1x1xf32, #tpu.memory_space<smem>>
    %cst_13 = arith.constant 0.000000e+00 : f32
    %19 = vector.broadcast %cst_13 : f32 to vector<8x128xf32>
    %20 = arith.maximumf %19, %17 : vector<8x128xf32>
    %21 = vector.broadcast %18 : f32 to vector<8x128xf32>
    %22 = arith.minimumf %21, %20 : vector<8x128xf32>
    %c0_14 = arith.constant 0 : index
    %c0_15 = arith.constant 0 : index
    %23 = vector.load %arg7[%c0_14, %c0_15] : memref<8x128xf32, #tpu.memory_space<vmem>>, vector<8x128xf32>
    tpu.vector_store %arg7[%c0_14, %c0_15], %22 {strides = array<i32>} : memref<8x128xf32, #tpu.memory_space<vmem>>, vector<8x128xf32>,
    return
  }
  func.func @transform_0(%arg0: i32) -> (i32, i32) {
    %c0_i32 = arith.constant 0 : i32
    %c0_i32_0 = arith.constant 0 : i32
    %c0_i32_1 = arith.constant 0 : i32
    return %c0_i32, %c0_i32_0 : i32, i32
  }
  func.func @transform_1(%arg0: i32) -> (i32, i32) {
    %c0_i32 = arith.constant 0 : i32
    %c0_i32_0 = arith.constant 0 : i32
    return %arg0, %c0_i32 : i32, i32
  }
  func.func @transform_2(%arg0: i32) -> (i32, i32) {
    %c0_i32 = arith.constant 0 : i32
    %c0_i32_0 = arith.constant 0 : i32
    %c0_i32_1 = arith.constant 0 : i32
    return %c0_i32, %c0_i32_0 : i32, i32
  }
  func.func @transform_3(%arg0: i32) -> (i32, i32) {
    %c0_i32 = arith.constant 0 : i32
    %c0_i32_0 = arith.constant 0 : i32
    %c0_i32_1 = arith.constant 0 : i32
    return %c0_i32, %c0_i32_0 : i32, i32
  }
  func.func @transform_4(%arg0: i32) -> (i32, i32) {
    %c0_i32 = arith.constant 0 : i32
    %c0_i32_0 = arith.constant 0 : i32
    %c0_i32_1 = arith.constant 0 : i32
    return %c0_i32, %c0_i32_0 : i32, i32
  }
  func.func @transform_5(%arg0: i32) -> (i32, i32) {
    %c0_i32 = arith.constant 0 : i32
    %c0_i32_0 = arith.constant 0 : i32
    %c0_i32_1 = arith.constant 0 : i32
    return %c0_i32, %c0_i32_0 : i32, i32
  }
  func.func @transform_6(%arg0: i32) -> (i32, i32) {
    %c0_i32 = arith.constant 0 : i32
    %c0_i32_0 = arith.constant 0 : i32
    return %arg0, %c0_i32 : i32, i32
  }
}

</mosaic_0001>

<llo_original>
// kernel: _forward_padded.1
$region0: #{_forward_padded.1}
  #allocation0 [shape = 'u32[]', space=smem, size = 0x4, offset = 0x4, fixed_abs, tag = 'smem constant byte address 0x4 - core index']
  #allocation1 [shape = 'u32[144,128]{1,0:T(1,128)}', space=vmem, size = 0x12000, scoped, tag = 'internal scratch']
  #allocation2 [shape = 'f32[1,1]{1,0:T(1,128)S(6)}', space=smem, size = 0x200, scoped, tag = 'scoped memory for _forward_padded.1']
  %s0 = inlined_call_operand.<no memory space> [shape: f32[1,1], index: 0, kind: input, shape index: {}]
  %s1 = inlined_call_operand.vmem [shape: s32[8,1], index: 1, kind: input, shape index: {}]
  %s2 = inlined_call_operand.hbm [shape: f32[128,128], index: 2, kind: input, shape index: {}]
  %s3 = inlined_call_operand.vmem [shape: f32[1,128], index: 3, kind: input, shape index: {}]
  %s4 = inlined_call_operand.hbm [shape: f32[128,128], index: 4, kind: input, shape index: {}]
  %s5 = inlined_call_operand.vmem [shape: f32[1,128], index: 5, kind: input, shape index: {}]
  %s6 = inlined_call_operand.vmem [shape: f32[8,128], index: 6, kind: output, shape index: {}]
  %s7 = sld [smem:[#allocation0]]
  $region42: #{_forward_padded.1} parent=0
    _
  %s9 = ssub.s32 1, %s7
  %s10 = scalar_select 0, %s9, %s7
  %11 = sst [smem:[#allocation2]] %s0
  $region1: #{_forward_padded.1} parent=0
    #allocation3 [shape = 'u8[65536]{0}', space=vmem, size = 0x10000, scoped, tag = 'input window, operand 2, single buffered']
    #allocation4 [shape = 's32[1]{0}', space=sflag, size = 0x4, scoped, tag = 'scoped memory for _forward_padded.1']
    #allocation5 [shape = 'u8[65536]{0}', space=vmem, size = 0x10000, scoped, tag = 'input window, operand 4, single buffered']
    #allocation6 [shape = 's32[1]{0}', space=sflag, size = 0x4, scoped, tag = 'scoped memory for _forward_padded.1']
    %12 = vsyncpa [#allocation4], 0
    %13 = vsyncpa [#allocation6], 0
    // Predicated region
    $region2: #{_forward_padded.1} parent=1 // pred_check
      _
    $region3: #{_forward_padded.1} parent=1 // pred_check_branch
      %15 = sbr.rel (0) target = $region5
    $region4: #{_forward_padded.1} parent=1 // pred_region
      _
    $region5: #{_forward_padded.1} parent=1 // pred_fallthru
      _
    // Predicated region
    $region6: #{_forward_padded.1} parent=1 // pred_check
      _
    $region7: #{_forward_padded.1} parent=1 // pred_check_branch
      %17 = sbr.rel (0) target = $region9
    $region8: #{_forward_padded.1} parent=1 // pred_region
      _
    $region9: #{_forward_padded.1} parent=1 // pred_fallthru
      _
    // Predicated region
    $region10: #{_forward_padded.1} parent=1 // pred_check
      _
    $region11: #{_forward_padded.1} parent=1 // pred_check_branch
      %19 = sbr.rel (0) target = $region13
    $region12: #{_forward_padded.1} parent=1 // pred_region
      %s21 = ssub.s32 2048, 2048
      %22 = vsyncadd [#allocation4], %s21
      %s23 = sshll.u32 [#allocation3], 4
      %s24 = int_to_ptr.vmem [resolvable:$true] %s23
      %29 = dma.hbm_to_vmem [thread:$0]  %s2, 2048, %s24, [#allocation4], 128, 128, 8
    $region13: #{_forward_padded.1} parent=1 // pred_fallthru
      _
    // Predicated region
    $region14: #{_forward_padded.1} parent=1 // pred_check
      _
    $region15: #{_forward_padded.1} parent=1 // pred_check_branch
      %31 = sbr.rel (0) target = $region17
    $region16: #{_forward_padded.1} parent=1 // pred_region
      _
    $region17: #{_forward_padded.1} parent=1 // pred_fallthru
      _
    // Predicated region
    $region18: #{_forward_padded.1} parent=1 // pred_check
      _
    $region19: #{_forward_padded.1} parent=1 // pred_check_branch
      %33 = sbr.rel (0) target = $region21
    $region20: #{_forward_padded.1} parent=1 // pred_region
      %s35 = ssub.s32 2048, 2048
      %36 = vsyncadd [#allocation6], %s35
      %s37 = sshll.u32 [#allocation5], 4
      %s38 = int_to_ptr.vmem [resolvable:$true] %s37
      %43 = dma.hbm_to_vmem [thread:$0]  %s4, 2048, %s38, [#allocation6], 128, 128, 8
    $region21: #{_forward_padded.1} parent=1 // pred_fallthru
      _
    // Predicated region
    $region22: #{_forward_padded.1} parent=1 // pred_check
      _
    $region23: #{_forward_padded.1} parent=1 // pred_check_branch
      %45 = sbr.rel (0) target = $region25
    $region24: #{_forward_padded.1} parent=1 // pred_region
      _
    $region25: #{_forward_padded.1} parent=1 // pred_fallthru
      _
    // Predicated region
    $region26: #{_forward_padded.1} parent=1 // pred_check
      _
    $region27: #{_forward_padded.1} parent=1 // pred_check_branch
      %47 = sbr.rel (0) target = $region29
    $region28: #{_forward_padded.1} parent=1 // pred_region
      %48 = dma.done [#allocation4], 2048
    $region29: #{_forward_padded.1} parent=1 // pred_fallthru
      _
    // Predicated region
    $region30: #{_forward_padded.1} parent=1 // pred_check
      _
    $region31: #{_forward_padded.1} parent=1 // pred_check_branch
      %50 = sbr.rel (0) target = $region33
    $region32: #{_forward_padded.1} parent=1 // pred_region
      %51 = dma.done [#allocation6], 2048
    $region33: #{_forward_padded.1} parent=1 // pred_fallthru
      _
    %v52 = vld [vmem:[%s1] sm:$0xff]
    %v53 = vlaneseq
    %v54 = vand.u32 %v53, 127
    %55 = vset.pattern.permute.xlu0 0
    %56 = vperm.xlu0 %55, %v52
    %v57 = vpop.permute.xlu0 %56
    %vm58 = vcmp.eq.s32.totalorder %v54, %v57
    %v59 = vsel %vm58, 1, 0
    %v60 = vcvt.s32.f32 %v59
    %v61 = vld [vmem:[#allocation3] sm:$0xff]
    %v62 = vld [vmem:[#allocation3 + $0x8] sm:$0xff]
    %v63 = vld [vmem:[#allocation3 + $0x10] sm:$0xff]
    %v64 = vld [vmem:[#allocation3 + $0x18] sm:$0xff]
    %v65 = vld [vmem:[#allocation3 + $0x20] sm:$0xff]
    %v66 = vld [vmem:[#allocation3 + $0x28] sm:$0xff]
    %v67 = vld [vmem:[#allocation3 + $0x30] sm:$0xff]
    %v68 = vld [vmem:[#allocation3 + $0x38] sm:$0xff]
    %v69 = vld [vmem:[#allocation3 + $0x40] sm:$0xff]
    %v70 = vld [vmem:[#allocation3 + $0x48] sm:$0xff]
    %v71 = vld [vmem:[#allocation3 + $0x50] sm:$0xff]
    %v72 = vld [vmem:[#allocation3 + $0x58] sm:$0xff]
    %v73 = vld [vmem:[#allocation3 + $0x60] sm:$0xff]
    %v74 = vld [vmem:[#allocation3 + $0x68] sm:$0xff]
    %v75 = vld [vmem:[#allocation3 + $0x70] sm:$0xff]
    %v76 = vld [vmem:[#allocation3 + $0x78] sm:$0xff]
    %v77 = vld [vmem:[%s3] sm:$0x1]
    %v79 = vlaneseq
    %v80 = vshrl.u32 %v79, 7
    %v81 = vsub.s32 0, %v80
    %v82 = vrot.slane %v77, %v81
    %84 = vmatprep.subr.mxu0 0.0
    %85 = vmatpush1.msra.mxu0 %v76
    %86 = vmatprep.subr.mxu0 0.0
    %87 = vmatpush1.msra.mxu0 %v75
    %88 = vmatprep.subr.mxu0 0.0
    %89 = vmatpush1.msra.mxu0 %v74
    %90 = vmatprep.subr.mxu0 0.0
    %91 = vmatpush1.msra.mxu0 %v73
    %92 = vmatprep.subr.mxu0 0.0
    %93 = vmatpush1.msra.mxu0 %v72
    %94 = vmatprep.subr.mxu0 0.0
    %95 = vmatpush1.msra.mxu0 %v71
    %96 = vmatprep.subr.mxu0 0.0
    %97 = vmatpush1.msra.mxu0 %v70
    %98 = vmatprep.subr.mxu0 0.0
    %99 = vmatpush1.msra.mxu0 %v69
    %100 = vmatprep.subr.mxu0 0.0
    %101 = vmatpush1.msra.mxu0 %v68
    %102 = vmatprep.subr.mxu0 0.0
    %103 = vmatpush1.msra.mxu0 %v67
    %104 = vmatprep.subr.mxu0 0.0
    %105 = vmatpush1.msra.mxu0 %v66
    %106 = vmatprep.subr.mxu0 0.0
    %107 = vmatpush1.msra.mxu0 %v65
    %108 = vmatprep.subr.mxu0 0.0
    %109 = vmatpush1.msra.mxu0 %v64
    %110 = vmatprep.subr.mxu0 0.0
    %111 = vmatpush1.msra.mxu0 %v63
    %112 = vmatprep.subr.mxu0 0.0
    %113 = vmatpush1.msra.mxu0 %v62
    %114 = vmatprep.subr.mxu0 0.0
    %115 = vmatpush1.msra.mxu0 %v61
    %116 = vmatprep.subr.mxu0 0.0
    %117 = vmatpush2.msra.mxu0 0.0
    %118 = vmatprep.subr.mxu0 0.0
    %119 = vmatpush2.msra.mxu0 0.0
    %120 = vmatprep.subr.mxu0 0.0
    %121 = vmatpush2.msra.mxu0 0.0
    %122 = vmatprep.subr.mxu0 0.0
    %123 = vmatpush2.msra.mxu0 0.0
    %124 = vmatprep.subr.mxu0 0.0
    %125 = vmatpush2.msra.mxu0 0.0
    %126 = vmatprep.subr.mxu0 0.0
    %127 = vmatpush2.msra.mxu0 0.0
    %128 = vmatprep.subr.mxu0 0.0
    %129 = vmatpush2.msra.mxu0 0.0
    %130 = vmatprep.subr.mxu0 0.0
    %131 = vmatpush2.msra.mxu0 0.0
    %132 = vmatprep.subr.mxu0 0.0
    %133 = vmatpush2.msra.mxu0 0.0
    %134 = vmatprep.subr.mxu0 0.0
    %135 = vmatpush2.msra.mxu0 0.0
    %136 = vmatprep.subr.mxu0 0.0
    %137 = vmatpush2.msra.mxu0 0.0
    %138 = vmatprep.subr.mxu0 0.0
    %139 = vmatpush2.msra.mxu0 0.0
    %140 = vmatprep.subr.mxu0 0.0
    %141 = vmatpush2.msra.mxu0 0.0
    %142 = vmatprep.subr.mxu0 0.0
    %143 = vmatpush2.msra.mxu0 0.0
    %144 = vmatprep.subr.mxu0 0.0
    %145 = vmatpush2.msra.mxu0 0.0
    %146 = vmatprep.subr.mxu0 0.0
    %147 = vmatpush2.msra.mxu0 0.0
    %148 = vmatprep.mubr.f32.mxu0 0.0
    %149 = vmatmul.mubr.f32.gmra.mxu0 %v60
    %v150 = vpop.f32.mrf.mxu0
    %v151 = vadd.f32 %v82, %v150
    %v152 = vpop.f32.mrf.mxu0
    %153 = vdwg.mxu0
    %v154 = vmax.f32 %v151, 0.0
    %v155 = vld [vmem:[#allocation5] sm:$0xff]
    %v156 = vld [vmem:[#allocation5 + $0x8] sm:$0xff]
    %v157 = vld [vmem:[#allocation5 + $0x10] sm:$0xff]
    %v158 = vld [vmem:[#allocation5 + $0x18] sm:$0xff]
    %v159 = vld [vmem:[#allocation5 + $0x20] sm:$0xff]
    %v160 = vld [vmem:[#allocation5 + $0x28] sm:$0xff]
    %v161 = vld [vmem:[#allocation5 + $0x30] sm:$0xff]
    %v162 = vld [vmem:[#allocation5 + $0x38] sm:$0xff]
    %v163 = vld [vmem:[#allocation5 + $0x40] sm:$0xff]
    %v164 = vld [vmem:[#allocation5 + $0x48] sm:$0xff]
    %v165 = vld [vmem:[#allocation5 + $0x50] sm:$0xff]
    %v166 = vld [vmem:[#allocation5 + $0x58] sm:$0xff]
    %v167 = vld [vmem:[#allocation5 + $0x60] sm:$0xff]
    %v168 = vld [vmem:[#allocation5 + $0x68] sm:$0xff]
    %v169 = vld [vmem:[#allocation5 + $0x70] sm:$0xff]
    %v170 = vld [vmem:[#allocation5 + $0x78] sm:$0xff]
    %v171 = vld [vmem:[%s5] sm:$0x1]
    %v173 = vlaneseq
    %v174 = vshrl.u32 %v173, 7
    %v175 = vsub.s32 0, %v174
    %v176 = vrot.slane %v171, %v175
    %178 = vmatprep.subr.mxu0 0.0
    %179 = vmatpush1.msra.mxu0 %v170
    %180 = vmatprep.subr.mxu0 0.0
    %181 = vmatpush1.msra.mxu0 %v169
    %182 = vmatprep.subr.mxu0 0.0
    %183 = vmatpush1.msra.mxu0 %v168
    %184 = vmatprep.subr.mxu0 0.0
    %185 = vmatpush1.msra.mxu0 %v167
    %186 = vmatprep.subr.mxu0 0.0
    %187 = vmatpush1.msra.mxu0 %v166
    %188 = vmatprep.subr.mxu0 0.0
    %189 = vmatpush1.msra.mxu0 %v165
    %190 = vmatprep.subr.mxu0 0.0
    %191 = vmatpush1.msra.mxu0 %v164
    %192 = vmatprep.subr.mxu0 0.0
    %193 = vmatpush1.msra.mxu0 %v163
    %194 = vmatprep.subr.mxu0 0.0
    %195 = vmatpush1.msra.mxu0 %v162
    %196 = vmatprep.subr.mxu0 0.0
    %197 = vmatpush1.msra.mxu0 %v161
    %198 = vmatprep.subr.mxu0 0.0
    %199 = vmatpush1.msra.mxu0 %v160
    %200 = vmatprep.subr.mxu0 0.0
    %201 = vmatpush1.msra.mxu0 %v159
    %202 = vmatprep.subr.mxu0 0.0
    %203 = vmatpush1.msra.mxu0 %v158
    %204 = vmatprep.subr.mxu0 0.0
    %205 = vmatpush1.msra.mxu0 %v157
    %206 = vmatprep.subr.mxu0 0.0
    %207 = vmatpush1.msra.mxu0 %v156
    %208 = vmatprep.subr.mxu0 0.0
    %209 = vmatpush1.msra.mxu0 %v155
    %210 = vmatprep.subr.mxu0 0.0
    %211 = vmatpush2.msra.mxu0 0.0
    %212 = vmatprep.subr.mxu0 0.0
    %213 = vmatpush2.msra.mxu0 0.0
    %214 = vmatprep.subr.mxu0 0.0
    %215 = vmatpush2.msra.mxu0 0.0
    %216 = vmatprep.subr.mxu0 0.0
    %217 = vmatpush2.msra.mxu0 0.0
    %218 = vmatprep.subr.mxu0 0.0
    %219 = vmatpush2.msra.mxu0 0.0
    %220 = vmatprep.subr.mxu0 0.0
    %221 = vmatpush2.msra.mxu0 0.0
    %222 = vmatprep.subr.mxu0 0.0
    %223 = vmatpush2.msra.mxu0 0.0
    %224 = vmatprep.subr.mxu0 0.0
    %225 = vmatpush2.msra.mxu0 0.0
    %226 = vmatprep.subr.mxu0 0.0
    %227 = vmatpush2.msra.mxu0 0.0
    %228 = vmatprep.subr.mxu0 0.0
    %229 = vmatpush2.msra.mxu0 0.0
    %230 = vmatprep.subr.mxu0 0.0
    %231 = vmatpush2.msra.mxu0 0.0
    %232 = vmatprep.subr.mxu0 0.0
    %233 = vmatpush2.msra.mxu0 0.0
    %234 = vmatprep.subr.mxu0 0.0
    %235 = vmatpush2.msra.mxu0 0.0
    %236 = vmatprep.subr.mxu0 0.0
    %237 = vmatpush2.msra.mxu0 0.0
    %238 = vmatprep.subr.mxu0 0.0
    %239 = vmatpush2.msra.mxu0 0.0
    %240 = vmatprep.subr.mxu0 0.0
    %241 = vmatpush2.msra.mxu0 0.0
    %242 = vmatprep.mubr.f32.mxu0 0.0
    %243 = vmatmul.mubr.f32.gmra.mxu0 %v154
    %v244 = vpop.f32.mrf.mxu0
    %v245 = vadd.f32 %v176, %v244
    %v246 = vpop.f32.mrf.mxu0
    %247 = vdwg.mxu0
    %s248 = sld [smem:[#allocation2]]
    %v249 = vmax.f32 %v245, 0.0
    %v250 = vstv %s248
    %v251 = vmin.f32 %v250, %v249
    %252 = vst [vmem:[%s6] sm:$0xff] %v251
    // Predicated region
    $region34: #{_forward_padded.1} parent=1 // pred_check
      _
    $region35: #{_forward_padded.1} parent=1 // pred_check_branch
      %254 = sbr.rel (0) target = $region37
    $region36: #{_forward_padded.1} parent=1 // pred_region
      _
    $region37: #{_forward_padded.1} parent=1 // pred_fallthru
      _
    // Predicated region
    $region38: #{_forward_padded.1} parent=1 // pred_check
      _
    $region39: #{_forward_padded.1} parent=1 // pred_check_branch
      %256 = sbr.rel (0) target = $region41
    $region40: #{_forward_padded.1} parent=1 // pred_region
      _
    $region41: #{_forward_padded.1} parent=1 // pred_fallthru
      _
    %257 = vsyncpa [#allocation4], 1
    %258 = vsyncpa [#allocation6], 1

</llo_original>
